<compile_context>
chip_gen: v7x
topology: tpu7x:2x2x1
jax: 0.10.0
libtpu: 0.0.40
codegen_flags: <defaults>
</compile_context>

<pallas_src>
import functools

import jax
import jax.numpy as jnp
from jax.experimental import pallas as pl
from jax.experimental.pallas import tpu as pltpu


def controlnet_kernel(x_ref, w1_ref, b1_ref, w2_ref, b2_ref, w3_ref, b3_ref, o_ref):
    # x_ref: (block_b, n_input) f32 -- batch on the sublane axis, no transposes needed.
    x = x_ref[...]

    # layer1 + ReLU : (block_b, n_input) @ (n_input, n_hidden)
    h1 = jnp.dot(x, w1_ref[...], preferred_element_type=jnp.float32) + b1_ref[...]
    h1 = jnp.maximum(h1, 0.0)

    # layer2 + ReLU : (block_b, n_hidden) @ (n_hidden, n_hidden)
    h2 = jnp.dot(h1, w2_ref[...], preferred_element_type=jnp.float32) + b2_ref[...]
    h2 = jnp.maximum(h2, 0.0)

    # layer3 (no activation) : (block_b, n_hidden) @ (n_hidden, n_output)
    out = jnp.dot(h2, w3_ref[...], preferred_element_type=jnp.float32) + b3_ref[...]

    # Store directly in the final output dtype (no wrapper .astype pass).
    o_ref[...] = out.astype(o_ref.dtype)


def _pick_block_b(B, max_block=1024):
    """Single full-batch tile (grid = 1) whenever it fits; otherwise 1024-row tiles.

    1024 keeps the f32 intermediates (n_hidden * block_b * 4 B) around the vreg-file
    size and per-tile VMEM a few MB, so it is safe on v5e/v6e (128 MiB) and v7x (64 MiB)
    alike, while amortizing the ~600-cycle per-grid-step overhead."""
    if B <= max_block:
        return B
    return max_block  # multiple of 8; partial last tile is handled (rows independent)


@functools.partial(jax.jit, static_argnames=("block_b",))
def controlnet_forward(x, w1, b1, w2, b2, w3, b3, *, block_b=None):
    """x: (B, n_input) f32. Weights in torch layout (out, in); biases (out, 1)."""
    B, n_input = x.shape
    n_hidden = w1.shape[0]
    n_output = w3.shape[0]
    if block_b is None:
        block_b = _pick_block_b(B)
    grid = (pl.cdiv(B, block_b),)

    # Weights pre-transposed to (in, out); biases reshaped to (1, out).  These are
    # tiny weight-sized ops done once per call -- NOT per-batch passes over x/out.
    w1t = w1.T
    w2t = w2.T
    w3t = w3.T
    b1r = b1.reshape(1, n_hidden)
    b2r = b2.reshape(1, n_hidden)
    b3r = b3.reshape(1, n_output)

    return pl.pallas_call(
        controlnet_kernel,
        out_shape=jax.ShapeDtypeStruct((B, n_output), x.dtype),
        grid_spec=pltpu.PrefetchScalarGridSpec(
            num_scalar_prefetch=0,
            grid=grid,
            in_specs=[
                pl.BlockSpec((block_b, n_input), lambda i: (i, 0)),     # x tile (streams)
                pl.BlockSpec((n_input, n_hidden), lambda i: (0, 0)),    # W1^T (resident)
                pl.BlockSpec((1, n_hidden), lambda i: (0, 0)),          # b1
                pl.BlockSpec((n_hidden, n_hidden), lambda i: (0, 0)),   # W2^T
                pl.BlockSpec((1, n_hidden), lambda i: (0, 0)),          # b2
                pl.BlockSpec((n_hidden, n_output), lambda i: (0, 0)),   # W3^T
                pl.BlockSpec((1, n_output), lambda i: (0, 0)),          # b3
            ],
            out_specs=pl.BlockSpec((block_b, n_output), lambda i: (i, 0)),
        ),
        compiler_params=pltpu.CompilerParams(
            # Usually grid=1, so this axis is just a (possibly empty) sequential loop.
            dimension_semantics=("arbitrary",),
        ),
    )(x, w1t, b1r, w2t, b2r, w3t, b3r)


def init_linear_params(key, in_features, out_features):
    """torch.nn.Linear-style init: uniform(-1/sqrt(in), 1/sqrt(in)).
    Weight in torch layout (out_features, in_features); bias (out_features, 1)."""
    kw, kb = jax.random.split(key)
    bound = 1.0 / jnp.sqrt(jnp.float32(in_features))
    w = jax.random.uniform(kw, (out_features, in_features), jnp.float32,
                           minval=-bound, maxval=bound)
    b = jax.random.uniform(kb, (out_features, 1), jnp.float32,
                           minval=-bound, maxval=bound)
    return w, b


def reference_forward_f32(x, w1, b1, w2, b2, w3, b3):
    """Full-f32 reference (HIGHEST precision so XLA does not bf16-truncate on TPU)."""
    p = jax.lax.Precision.HIGHEST
    h1 = jnp.maximum(jnp.dot(x, w1.T, precision=p) + b1.T, 0.0)
    h2 = jnp.maximum(jnp.dot(h1, w2.T, precision=p) + b2.T, 0.0)
    return jnp.dot(h2, w3.T, precision=p) + b3.T


if __name__ == "__main__":
    # Module shapes: ControlNet(n_input=2, n_hidden=32, n_output=2), batch=256.
    # batch=256 <= 1024 -> block_b=256 -> grid=(1,): single tile, minimal overhead.
    n_input, n_hidden, n_output = 2, 32, 2
    batch = 256

    key = jax.random.PRNGKey(0)
    kx, k1, k2, k3 = jax.random.split(key, 4)

    x = jax.random.normal(kx, (batch, n_input), jnp.float32)
    w1, b1 = init_linear_params(k1, n_input, n_hidden)
    w2, b2 = init_linear_params(k2, n_hidden, n_hidden)
    w3, b3 = init_linear_params(k3, n_hidden, n_output)

    out = controlnet_forward(x, w1, b1, w2, b2, w3, b3)
    out = jax.block_until_ready(out)

    ref = reference_forward_f32(x, w1, b1, w2, b2, w3, b3)
    assert out.shape == (batch, n_output)
    assert out.dtype == x.dtype
    # Tolerance covers the possibility that the MXU f32 path truncates matmul
    # operands toward bf16 (~2^-8 relative); real layout/weight bugs are O(1).
    assert jnp.allclose(out, ref, atol=2e-2, rtol=2e-2), "mismatch vs f32 reference"

    # Exercise the multi-tile + partial-last-tile path (B=200, block_b=128 -> grid=2,
    # last tile has 72 valid rows).  Rows are independent, so padding is discarded.
    x2 = jax.random.normal(kx, (200, n_input), jnp.float32)
    out2 = jax.block_until_ready(
        controlnet_forward(x2, w1, b1, w2, b2, w3, b3, block_b=128))
    ref2 = reference_forward_f32(x2, w1, b1, w2, b2, w3, b3)
    assert out2.shape == (200, n_output)
    assert jnp.allclose(out2, ref2, atol=2e-2, rtol=2e-2), "mismatch on partial-tile path"

    print("KERNEL_OK")
</pallas_src>

<mosaic_0001>
module attributes {stable_mosaic.version = 11 : i64} {
  func.func @controlnet_kernel(%arg0: i32, %arg1: memref<256x2xf32, #tpu.memory_space<vmem>>, %arg2: memref<2x32xf32, #tpu.memory_space<vmem>>, %arg3: memref<1x32xf32, #tpu.memory_space<vmem>>, %arg4: memref<32x32xf32, #tpu.memory_space<vmem>>, %arg5: memref<1x32xf32, #tpu.memory_space<vmem>>, %arg6: memref<32x2xf32, #tpu.memory_space<vmem>>, %arg7: memref<1x2xf32, #tpu.memory_space<vmem>>, %arg8: memref<256x2xf32, #tpu.memory_space<vmem>>) attributes {dimension_semantics = [#tpu.dimension_semantics<arbitrary>], iteration_bounds = array<i64: 1>, scalar_prefetch = 0 : i64, scratch_operands = 0 : i64, tpu.core_type = #tpu.core_type<tc>, window_params = [{transform_indices = @transform_0, window_bounds = array<i64: 256, 2>}, {pipeline_mode = #tpu.pipeline_mode<synchronous>, transform_indices = @transform_1, window_bounds = array<i64: 2, 32>}, {pipeline_mode = #tpu.pipeline_mode<synchronous>, transform_indices = @transform_2, window_bounds = array<i64: 1, 32>}, {pipeline_mode = #tpu.pipeline_mode<synchronous>, transform_indices = @transform_3, window_bounds = array<i64: 32, 32>}, {pipeline_mode = #tpu.pipeline_mode<synchronous>, transform_indices = @transform_4, window_bounds = array<i64: 1, 32>}, {pipeline_mode = #tpu.pipeline_mode<synchronous>, transform_indices = @transform_5, window_bounds = array<i64: 32, 2>}, {pipeline_mode = #tpu.pipeline_mode<synchronous>, transform_indices = @transform_6, window_bounds = array<i64: 1, 2>}, {transform_indices = @transform_7, window_bounds = array<i64: 256, 2>}]} {
    %c0 = arith.constant 0 : index
    %c0_0 = arith.constant 0 : index
    %0 = vector.load %arg1[%c0, %c0_0] : memref<256x2xf32, #tpu.memory_space<vmem>>, vector<256x2xf32>
    %c0_1 = arith.constant 0 : index
    %c0_2 = arith.constant 0 : index
    %1 = vector.load %arg2[%c0_1, %c0_2] : memref<2x32xf32, #tpu.memory_space<vmem>>, vector<2x32xf32>
    %cst = arith.constant dense<0.000000e+00> : vector<256x32xf32>
    %2 = tpu.matmul %0, %1, %cst {dimension_numbers = #tpu.dot_dimension_numbers<[1], [0], [0], [1], [0, 0, 1, 1], [], []>} : vector<256x2xf32>, vector<2x32xf32>, vector<256x32xf32> -> vector<256x32xf32>
    %c0_3 = arith.constant 0 : index
    %c0_4 = arith.constant 0 : index
    %3 = vector.load %arg3[%c0_3, %c0_4] : memref<1x32xf32, #tpu.memory_space<vmem>>, vector<1x32xf32>
    %4 = vector.broadcast %3 : vector<1x32xf32> to vector<256x32xf32>
    %5 = arith.addf %2, %4 : vector<256x32xf32>
    %cst_5 = arith.constant 0.000000e+00 : f32
    %6 = vector.broadcast %cst_5 : f32 to vector<256x32xf32>
    %7 = arith.maximumf %5, %6 : vector<256x32xf32>
    %c0_6 = arith.constant 0 : index
    %c0_7 = arith.constant 0 : index
    %8 = vector.load %arg4[%c0_6, %c0_7] : memref<32x32xf32, #tpu.memory_space<vmem>>, vector<32x32xf32>
    %cst_8 = arith.constant dense<0.000000e+00> : vector<256x32xf32>
    %9 = tpu.matmul %7, %8, %cst_8 {dimension_numbers = #tpu.dot_dimension_numbers<[1], [0], [0], [1], [0, 0, 1, 1], [], []>} : vector<256x32xf32>, vector<32x32xf32>, vector<256x32xf32> -> vector<256x32xf32>
    %c0_9 = arith.constant 0 : index
    %c0_10 = arith.constant 0 : index
    %10 = vector.load %arg5[%c0_9, %c0_10] : memref<1x32xf32, #tpu.memory_space<vmem>>, vector<1x32xf32>
    %11 = vector.broadcast %10 : vector<1x32xf32> to vector<256x32xf32>
    %12 = arith.addf %9, %11 : vector<256x32xf32>
    %cst_11 = arith.constant 0.000000e+00 : f32
    %13 = vector.broadcast %cst_11 : f32 to vector<256x32xf32>
    %14 = arith.maximumf %12, %13 : vector<256x32xf32>
    %c0_12 = arith.constant 0 : index
    %c0_13 = arith.constant 0 : index
    %15 = vector.load %arg6[%c0_12, %c0_13] : memref<32x2xf32, #tpu.memory_space<vmem>>, vector<32x2xf32>
    %cst_14 = arith.constant dense<0.000000e+00> : vector<256x2xf32>
    %16 = tpu.matmul %14, %15, %cst_14 {dimension_numbers = #tpu.dot_dimension_numbers<[1], [0], [0], [1], [0, 0, 1, 1], [], []>} : vector<256x32xf32>, vector<32x2xf32>, vector<256x2xf32> -> vector<256x2xf32>
    %c0_15 = arith.constant 0 : index
    %c0_16 = arith.constant 0 : index
    %17 = vector.load %arg7[%c0_15, %c0_16] : memref<1x2xf32, #tpu.memory_space<vmem>>, vector<1x2xf32>
    %18 = vector.broadcast %17 : vector<1x2xf32> to vector<256x2xf32>
    %19 = arith.addf %16, %18 : vector<256x2xf32>
    %c0_17 = arith.constant 0 : index
    %c0_18 = arith.constant 0 : index
    %20 = vector.load %arg8[%c0_17, %c0_18] : memref<256x2xf32, #tpu.memory_space<vmem>>, vector<256x2xf32>
    tpu.vector_store %arg8[%c0_17, %c0_18], %19 {strides = array<i32>} : memref<256x2xf32, #tpu.memory_space<vmem>>, vector<256x2xf32>,
    return
  }
  func.func @transform_0(%arg0: i32) -> (i32, i32) {
    %c0_i32 = arith.constant 0 : i32
    %c0_i32_0 = arith.constant 0 : i32
    return %arg0, %c0_i32 : i32, i32
  }
  func.func @transform_1(%arg0: i32) -> (i32, i32) {
    %c0_i32 = arith.constant 0 : i32
    %c0_i32_0 = arith.constant 0 : i32
    %c0_i32_1 = arith.constant 0 : i32
    return %c0_i32, %c0_i32_0 : i32, i32
  }
  func.func @transform_2(%arg0: i32) -> (i32, i32) {
    %c0_i32 = arith.constant 0 : i32
    %c0_i32_0 = arith.constant 0 : i32
    %c0_i32_1 = arith.constant 0 : i32
    return %c0_i32, %c0_i32_0 : i32, i32
  }
  func.func @transform_3(%arg0: i32) -> (i32, i32) {
    %c0_i32 = arith.constant 0 : i32
    %c0_i32_0 = arith.constant 0 : i32
    %c0_i32_1 = arith.constant 0 : i32
    return %c0_i32, %c0_i32_0 : i32, i32
  }
  func.func @transform_4(%arg0: i32) -> (i32, i32) {
    %c0_i32 = arith.constant 0 : i32
    %c0_i32_0 = arith.constant 0 : i32
    %c0_i32_1 = arith.constant 0 : i32
    return %c0_i32, %c0_i32_0 : i32, i32
  }
  func.func @transform_5(%arg0: i32) -> (i32, i32) {
    %c0_i32 = arith.constant 0 : i32
    %c0_i32_0 = arith.constant 0 : i32
    %c0_i32_1 = arith.constant 0 : i32
    return %c0_i32, %c0_i32_0 : i32, i32
  }
  func.func @transform_6(%arg0: i32) -> (i32, i32) {
    %c0_i32 = arith.constant 0 : i32
    %c0_i32_0 = arith.constant 0 : i32
    %c0_i32_1 = arith.constant 0 : i32
    return %c0_i32, %c0_i32_0 : i32, i32
  }
  func.func @transform_7(%arg0: i32) -> (i32, i32) {
    %c0_i32 = arith.constant 0 : i32
    %c0_i32_0 = arith.constant 0 : i32
    return %arg0, %c0_i32 : i32, i32
  }
}

</mosaic_0001>

<llo_original>
// kernel: controlnet_forward.1
$region0: #{controlnet_forward.1}
  #allocation0 [shape = 'u32[]', space=smem, size = 0x4, offset = 0x4, fixed_abs, tag = 'smem constant byte address 0x4 - core index']
  #allocation1 [shape = 'u32[144,128]{1,0:T(1,128)}', space=vmem, size = 0x12000, scoped, tag = 'internal scratch']
  %s0 = inlined_call_operand.vmem [shape: f32[256,2], index: 0, kind: input, shape index: {}]
  %s1 = inlined_call_operand.vmem [shape: f32[2,32], index: 1, kind: input, shape index: {}]
  %s2 = inlined_call_operand.vmem [shape: f32[1,32], index: 2, kind: input, shape index: {}]
  %s3 = inlined_call_operand.vmem [shape: f32[32,32], index: 3, kind: input, shape index: {}]
  %s4 = inlined_call_operand.vmem [shape: f32[1,32], index: 4, kind: input, shape index: {}]
  %s5 = inlined_call_operand.vmem [shape: f32[32,2], index: 5, kind: input, shape index: {}]
  %s6 = inlined_call_operand.vmem [shape: f32[1,2], index: 6, kind: input, shape index: {}]
  %s7 = inlined_call_operand.vmem [shape: f32[256,2], index: 7, kind: output, shape index: {}]
  %s8 = sld [smem:[#allocation0]]
  $region38: #{controlnet_forward.1} parent=0
    _
  %s10 = ssub.s32 1, %s8
  %s11 = scalar_select 0, %s10, %s8
  // Predicated region
  $region2: #{controlnet_forward.1} parent=0 // pred_check
    _
  $region3: #{controlnet_forward.1} parent=0 // pred_check_branch
    %13 = sbr.rel (0) target = $region5
  $region4: #{controlnet_forward.1} parent=0 // pred_region
    _
  $region5: #{controlnet_forward.1} parent=0 // pred_fallthru
    _
  // Predicated region
  $region6: #{controlnet_forward.1} parent=0 // pred_check
    _
  $region7: #{controlnet_forward.1} parent=0 // pred_check_branch
    %15 = sbr.rel (0) target = $region9
  $region8: #{controlnet_forward.1} parent=0 // pred_region
    _
  $region9: #{controlnet_forward.1} parent=0 // pred_fallthru
    _
  // Predicated region
  $region10: #{controlnet_forward.1} parent=0 // pred_check
    _
  $region11: #{controlnet_forward.1} parent=0 // pred_check_branch
    %17 = sbr.rel (0) target = $region13
  $region12: #{controlnet_forward.1} parent=0 // pred_region
    _
  $region13: #{controlnet_forward.1} parent=0 // pred_fallthru
    _
  // Predicated region
  $region14: #{controlnet_forward.1} parent=0 // pred_check
    _
  $region15: #{controlnet_forward.1} parent=0 // pred_check_branch
    %19 = sbr.rel (0) target = $region17
  $region16: #{controlnet_forward.1} parent=0 // pred_region
    _
  $region17: #{controlnet_forward.1} parent=0 // pred_fallthru
    _
  // Predicated region
  $region18: #{controlnet_forward.1} parent=0 // pred_check
    _
  $region19: #{controlnet_forward.1} parent=0 // pred_check_branch
    %21 = sbr.rel (0) target = $region21
  $region20: #{controlnet_forward.1} parent=0 // pred_region
    _
  $region21: #{controlnet_forward.1} parent=0 // pred_fallthru
    _
  // Predicated region
  $region22: #{controlnet_forward.1} parent=0 // pred_check
    _
  $region23: #{controlnet_forward.1} parent=0 // pred_check_branch
    %23 = sbr.rel (0) target = $region25
  $region24: #{controlnet_forward.1} parent=0 // pred_region
    _
  $region25: #{controlnet_forward.1} parent=0 // pred_fallthru
    _
  // Predicated region
  $region26: #{controlnet_forward.1} parent=0 // pred_check
    _
  $region27: #{controlnet_forward.1} parent=0 // pred_check_branch
    %25 = sbr.rel (0) target = $region29
  $region28: #{controlnet_forward.1} parent=0 // pred_region
    _
  $region29: #{controlnet_forward.1} parent=0 // pred_fallthru
    _
  %v26 = vld [vmem:[%s0] sm:$0xff]
  %v27 = vld [vmem:[%s0 + $0x8] sm:$0xff]
  %v28 = vld [vmem:[%s0 + $0x10] sm:$0xff]
  %v29 = vld [vmem:[%s0 + $0x18] sm:$0xff]
  %v30 = vld [vmem:[%s0 + $0x20] sm:$0xff]
  %v31 = vld [vmem:[%s0 + $0x28] sm:$0xff]
  %v32 = vld [vmem:[%s0 + $0x30] sm:$0xff]
  %v33 = vld [vmem:[%s0 + $0x38] sm:$0xff]
  %v34 = vld [vmem:[%s0 + $0x40] sm:$0xff]
  %v35 = vld [vmem:[%s0 + $0x48] sm:$0xff]
  %v36 = vld [vmem:[%s0 + $0x50] sm:$0xff]
  %v37 = vld [vmem:[%s0 + $0x58] sm:$0xff]
  %v38 = vld [vmem:[%s0 + $0x60] sm:$0xff]
  %v39 = vld [vmem:[%s0 + $0x68] sm:$0xff]
  %v40 = vld [vmem:[%s0 + $0x70] sm:$0xff]
  %v41 = vld [vmem:[%s0 + $0x78] sm:$0xff]
  %v42 = vld [vmem:[%s0 + $0x80] sm:$0xff]
  %v43 = vld [vmem:[%s0 + $0x88] sm:$0xff]
  %v44 = vld [vmem:[%s0 + $0x90] sm:$0xff]
  %v45 = vld [vmem:[%s0 + $0x98] sm:$0xff]
  %v46 = vld [vmem:[%s0 + $0xa0] sm:$0xff]
  %v47 = vld [vmem:[%s0 + $0xa8] sm:$0xff]
  %v48 = vld [vmem:[%s0 + $0xb0] sm:$0xff]
  %v49 = vld [vmem:[%s0 + $0xb8] sm:$0xff]
  %v50 = vld [vmem:[%s0 + $0xc0] sm:$0xff]
  %v51 = vld [vmem:[%s0 + $0xc8] sm:$0xff]
  %v52 = vld [vmem:[%s0 + $0xd0] sm:$0xff]
  %v53 = vld [vmem:[%s0 + $0xd8] sm:$0xff]
  %v54 = vld [vmem:[%s0 + $0xe0] sm:$0xff]
  %v55 = vld [vmem:[%s0 + $0xe8] sm:$0xff]
  %v56 = vld [vmem:[%s0 + $0xf0] sm:$0xff]
  %v57 = vld [vmem:[%s0 + $0xf8] sm:$0xff]
  %v58 = vld [vmem:[%s1] sm:$0x3]
  %v59 = vld [vmem:[%s2] sm:$0x1]
  %v61 = vlaneseq
  %v62 = vshrl.u32 %v61, 7
  %v63 = vsub.s32 0, %v62
  %v64 = vrot.slane %v59, %v63
  %vm66 = vcmask 15360
  %v68 = vsel %vm66, %v26, 0
  %v71 = vsel %vm66, %v27, 0
  %v74 = vsel %vm66, %v28, 0
  %v77 = vsel %vm66, %v29, 0
  %v80 = vsel %vm66, %v30, 0
  %v83 = vsel %vm66, %v31, 0
  %v86 = vsel %vm66, %v32, 0
  %v89 = vsel %vm66, %v33, 0
  %v92 = vsel %vm66, %v34, 0
  %v95 = vsel %vm66, %v35, 0
  %v98 = vsel %vm66, %v36, 0
  %v101 = vsel %vm66, %v37, 0
  %v104 = vsel %vm66, %v38, 0
  %v107 = vsel %vm66, %v39, 0
  %v110 = vsel %vm66, %v40, 0
  %v113 = vsel %vm66, %v41, 0
  %v116 = vsel %vm66, %v42, 0
  %v119 = vsel %vm66, %v43, 0
  %v122 = vsel %vm66, %v44, 0
  %v125 = vsel %vm66, %v45, 0
  %v128 = vsel %vm66, %v46, 0
  %v131 = vsel %vm66, %v47, 0
  %v134 = vsel %vm66, %v48, 0
  %v137 = vsel %vm66, %v49, 0
  %v140 = vsel %vm66, %v50, 0
  %v143 = vsel %vm66, %v51, 0
  %v146 = vsel %vm66, %v52, 0
  %v149 = vsel %vm66, %v53, 0
  %v152 = vsel %vm66, %v54, 0
  %v155 = vsel %vm66, %v55, 0
  %v158 = vsel %vm66, %v56, 0
  %v161 = vsel %vm66, %v57, 0
  %vm163 = vcmask 1041408
  %v165 = vsel %vm163, %v58, 0
  %167 = vmatprep.subr.mxu0 0.0
  %168 = vmatpush1.msra.mxu0 %v165
  %169 = vmatprep.subr.mxu0 0.0
  %170 = vmatpush1.msra.mxu0 0.0
  %171 = vmatprep.subr.mxu0 0.0
  %172 = vmatpush1.msra.mxu0 0.0
  %173 = vmatprep.subr.mxu0 0.0
  %174 = vmatpush1.msra.mxu0 0.0
  %175 = vmatprep.subr.mxu0 0.0
  %176 = vmatpush1.msra.mxu0 0.0
  %177 = vmatprep.subr.mxu0 0.0
  %178 = vmatpush1.msra.mxu0 0.0
  %179 = vmatprep.subr.mxu0 0.0
  %180 = vmatpush1.msra.mxu0 0.0
  %181 = vmatprep.subr.mxu0 0.0
  %182 = vmatpush1.msra.mxu0 0.0
  %183 = vmatprep.subr.mxu0 0.0
  %184 = vmatpush1.msra.mxu0 0.0
  %185 = vmatprep.subr.mxu0 0.0
  %186 = vmatpush1.msra.mxu0 0.0
  %187 = vmatprep.subr.mxu0 0.0
  %188 = vmatpush1.msra.mxu0 0.0
  %189 = vmatprep.subr.mxu0 0.0
  %190 = vmatpush1.msra.mxu0 0.0
  %191 = vmatprep.subr.mxu0 0.0
  %192 = vmatpush1.msra.mxu0 0.0
  %193 = vmatprep.subr.mxu0 0.0
  %194 = vmatpush1.msra.mxu0 0.0
  %195 = vmatprep.subr.mxu0 0.0
  %196 = vmatpush1.msra.mxu0 0.0
  %197 = vmatprep.subr.mxu0 0.0
  %198 = vmatpush1.msra.mxu0 0.0
  %199 = vmatprep.subr.mxu0 0.0
  %200 = vmatpush1.msra.mxu0 0.0
  %201 = vmatprep.subr.mxu0 0.0
  %202 = vmatpush1.msra.mxu0 0.0
  %203 = vmatprep.subr.mxu0 0.0
  %204 = vmatpush1.msra.mxu0 0.0
  %205 = vmatprep.subr.mxu0 0.0
  %206 = vmatpush1.msra.mxu0 0.0
  %207 = vmatprep.subr.mxu0 0.0
  %208 = vmatpush1.msra.mxu0 0.0
  %209 = vmatprep.subr.mxu0 0.0
  %210 = vmatpush1.msra.mxu0 0.0
  %211 = vmatprep.subr.mxu0 0.0
  %212 = vmatpush1.msra.mxu0 0.0
  %213 = vmatprep.subr.mxu0 0.0
  %214 = vmatpush1.msra.mxu0 0.0
  %215 = vmatprep.subr.mxu0 0.0
  %216 = vmatpush1.msra.mxu0 0.0
  %217 = vmatprep.subr.mxu0 0.0
  %218 = vmatpush1.msra.mxu0 0.0
  %219 = vmatprep.subr.mxu0 0.0
  %220 = vmatpush1.msra.mxu0 0.0
  %221 = vmatprep.subr.mxu0 0.0
  %222 = vmatpush1.msra.mxu0 0.0
  %223 = vmatprep.subr.mxu0 0.0
  %224 = vmatpush1.msra.mxu0 0.0
  %225 = vmatprep.subr.mxu0 0.0
  %226 = vmatpush1.msra.mxu0 0.0
  %227 = vmatprep.subr.mxu0 0.0
  %228 = vmatpush1.msra.mxu0 0.0
  %229 = vmatprep.subr.mxu0 0.0
  %230 = vmatpush1.msra.mxu0 0.0
  %231 = vmatprep.mubr.f32.mxu0 0.0
  %232 = vmatmul.mubr.f32.gmra.mrb[0].mxu0 %v68
  %v233 = vpop.f32.mrb[0].mxu0
  %v234 = vadd.f32 %v64, %v233
  %v235 = vpop.f32.mrb[0].mxu0
  %236 = vmatprep.mubr.f32.mxu0 0.0
  %237 = vmatmul.mubr.f32.gmra.mrb[0].mxu0 %v71
  %v238 = vpop.f32.mrb[0].mxu0
  %v239 = vadd.f32 %v64, %v238
  %v240 = vpop.f32.mrb[0].mxu0
  %241 = vmatprep.mubr.f32.mxu0 0.0
  %242 = vmatmul.mubr.f32.gmra.mrb[0].mxu0 %v74
  %v243 = vpop.f32.mrb[0].mxu0
  %v244 = vadd.f32 %v64, %v243
  %v245 = vpop.f32.mrb[0].mxu0
  %246 = vmatprep.mubr.f32.mxu0 0.0
  %247 = vmatmul.mubr.f32.gmra.mrb[0].mxu0 %v77
  %v248 = vpop.f32.mrb[0].mxu0
  %v249 = vadd.f32 %v64, %v248
  %v250 = vpop.f32.mrb[0].mxu0
  %251 = vmatprep.mubr.f32.mxu0 0.0
  %252 = vmatmul.mubr.f32.gmra.mrb[0].mxu0 %v80
  %v253 = vpop.f32.mrb[0].mxu0
  %v254 = vadd.f32 %v64, %v253
  %v255 = vpop.f32.mrb[0].mxu0
  %256 = vmatprep.mubr.f32.mxu0 0.0
  %257 = vmatmul.mubr.f32.gmra.mrb[0].mxu0 %v83
  %v258 = vpop.f32.mrb[0].mxu0
  %v259 = vadd.f32 %v64, %v258
  %v260 = vpop.f32.mrb[0].mxu0
  %261 = vmatprep.mubr.f32.mxu0 0.0
  %262 = vmatmul.mubr.f32.gmra.mrb[0].mxu0 %v86
  %v263 = vpop.f32.mrb[0].mxu0
  %v264 = vadd.f32 %v64, %v263
  %v265 = vpop.f32.mrb[0].mxu0
  %266 = vmatprep.mubr.f32.mxu0 0.0
  %267 = vmatmul.mubr.f32.gmra.mrb[0].mxu0 %v89
  %v268 = vpop.f32.mrb[0].mxu0
  %v269 = vadd.f32 %v64, %v268
  %v270 = vpop.f32.mrb[0].mxu0
  %271 = vmatprep.mubr.f32.mxu0 0.0
  %272 = vmatmul.mubr.f32.gmra.mrb[0].mxu0 %v92
  %v273 = vpop.f32.mrb[0].mxu0
  %v274 = vadd.f32 %v64, %v273
  %v275 = vpop.f32.mrb[0].mxu0
  %276 = vmatprep.mubr.f32.mxu0 0.0
  %277 = vmatmul.mubr.f32.gmra.mrb[0].mxu0 %v95
  %v278 = vpop.f32.mrb[0].mxu0
  %v279 = vadd.f32 %v64, %v278
  %v280 = vpop.f32.mrb[0].mxu0
  %281 = vmatprep.mubr.f32.mxu0 0.0
  %282 = vmatmul.mubr.f32.gmra.mrb[0].mxu0 %v98
  %v283 = vpop.f32.mrb[0].mxu0
  %v284 = vadd.f32 %v64, %v283
  %v285 = vpop.f32.mrb[0].mxu0
  %286 = vmatprep.mubr.f32.mxu0 0.0
  %287 = vmatmul.mubr.f32.gmra.mrb[0].mxu0 %v101
  %v288 = vpop.f32.mrb[0].mxu0
  %v289 = vadd.f32 %v64, %v288
  %v290 = vpop.f32.mrb[0].mxu0
  %291 = vmatprep.mubr.f32.mxu0 0.0
  %292 = vmatmul.mubr.f32.gmra.mrb[0].mxu0 %v104
  %v293 = vpop.f32.mrb[0].mxu0
  %v294 = vadd.f32 %v64, %v293
  %v295 = vpop.f32.mrb[0].mxu0
  %296 = vmatprep.mubr.f32.mxu0 0.0
  %297 = vmatmul.mubr.f32.gmra.mrb[0].mxu0 %v107
  %v298 = vpop.f32.mrb[0].mxu0
  %v299 = vadd.f32 %v64, %v298
  %v300 = vpop.f32.mrb[0].mxu0
  %301 = vmatprep.mubr.f32.mxu0 0.0
  %302 = vmatmul.mubr.f32.gmra.mrb[0].mxu0 %v110
  %v303 = vpop.f32.mrb[0].mxu0
  %v304 = vadd.f32 %v64, %v303
  %v305 = vpop.f32.mrb[0].mxu0
  %306 = vmatprep.mubr.f32.mxu0 0.0
  %307 = vmatmul.mubr.f32.gmra.mrb[0].mxu0 %v113
  %v308 = vpop.f32.mrb[0].mxu0
  %v309 = vadd.f32 %v64, %v308
  %v310 = vpop.f32.mrb[0].mxu0
  %311 = vmatprep.mubr.f32.mxu0 0.0
  %312 = vmatmul.mubr.f32.gmra.mrb[0].mxu0 %v116
  %v313 = vpop.f32.mrb[0].mxu0
  %v314 = vadd.f32 %v64, %v313
  %v315 = vpop.f32.mrb[0].mxu0
  %316 = vmatprep.mubr.f32.mxu0 0.0
  %317 = vmatmul.mubr.f32.gmra.mrb[0].mxu0 %v119
  %v318 = vpop.f32.mrb[0].mxu0
  %v319 = vadd.f32 %v64, %v318
  %v320 = vpop.f32.mrb[0].mxu0
  %321 = vmatprep.mubr.f32.mxu0 0.0
  %322 = vmatmul.mubr.f32.gmra.mrb[0].mxu0 %v122
  %v323 = vpop.f32.mrb[0].mxu0
  %v324 = vadd.f32 %v64, %v323
  %v325 = vpop.f32.mrb[0].mxu0
  %326 = vmatprep.mubr.f32.mxu0 0.0
  %327 = vmatmul.mubr.f32.gmra.mrb[0].mxu0 %v125
  %v328 = vpop.f32.mrb[0].mxu0
  %v329 = vadd.f32 %v64, %v328
  %v330 = vpop.f32.mrb[0].mxu0
  %331 = vmatprep.mubr.f32.mxu0 0.0
  %332 = vmatmul.mubr.f32.gmra.mrb[0].mxu0 %v128
  %v333 = vpop.f32.mrb[0].mxu0
  %v334 = vadd.f32 %v64, %v333
  %v335 = vpop.f32.mrb[0].mxu0
  %336 = vmatprep.mubr.f32.mxu0 0.0
  %337 = vmatmul.mubr.f32.gmra.mrb[0].mxu0 %v131
  %v338 = vpop.f32.mrb[0].mxu0
  %v339 = vadd.f32 %v64, %v338
  %v340 = vpop.f32.mrb[0].mxu0
  %341 = vmatprep.mubr.f32.mxu0 0.0
  %342 = vmatmul.mubr.f32.gmra.mrb[0].mxu0 %v134
  %v343 = vpop.f32.mrb[0].mxu0
  %v344 = vadd.f32 %v64, %v343
  %v345 = vpop.f32.mrb[0].mxu0
  %346 = vmatprep.mubr.f32.mxu0 0.0
  %347 = vmatmul.mubr.f32.gmra.mrb[0].mxu0 %v137
  %v348 = vpop.f32.mrb[0].mxu0
  %v349 = vadd.f32 %v64, %v348
  %v350 = vpop.f32.mrb[0].mxu0
  %351 = vmatprep.mubr.f32.mxu0 0.0
  %352 = vmatmul.mubr.f32.gmra.mrb[0].mxu0 %v140
  %v353 = vpop.f32.mrb[0].mxu0
  %v354 = vadd.f32 %v64, %v353
  %v355 = vpop.f32.mrb[0].mxu0
  %356 = vmatprep.mubr.f32.mxu0 0.0
  %357 = vmatmul.mubr.f32.gmra.mrb[0].mxu0 %v143
  %v358 = vpop.f32.mrb[0].mxu0
  %v359 = vadd.f32 %v64, %v358
  %v360 = vpop.f32.mrb[0].mxu0
  %361 = vmatprep.mubr.f32.mxu0 0.0
  %362 = vmatmul.mubr.f32.gmra.mrb[0].mxu0 %v146
  %v363 = vpop.f32.mrb[0].mxu0
  %v364 = vadd.f32 %v64, %v363
  %v365 = vpop.f32.mrb[0].mxu0
  %366 = vmatprep.mubr.f32.mxu0 0.0
  %367 = vmatmul.mubr.f32.gmra.mrb[0].mxu0 %v149
  %v368 = vpop.f32.mrb[0].mxu0
  %v369 = vadd.f32 %v64, %v368
  %v370 = vpop.f32.mrb[0].mxu0
  %371 = vmatprep.mubr.f32.mxu0 0.0
  %372 = vmatmul.mubr.f32.gmra.mrb[0].mxu0 %v152
  %v373 = vpop.f32.mrb[0].mxu0
  %v374 = vadd.f32 %v64, %v373
  %v375 = vpop.f32.mrb[0].mxu0
  %376 = vmatprep.mubr.f32.mxu0 0.0
  %377 = vmatmul.mubr.f32.gmra.mrb[0].mxu0 %v155
  %v378 = vpop.f32.mrb[0].mxu0
  %v379 = vadd.f32 %v64, %v378
  %v380 = vpop.f32.mrb[0].mxu0
  %381 = vmatprep.mubr.f32.mxu0 0.0
  %382 = vmatmul.mubr.f32.gmra.mrb[0].mxu0 %v158
  %v383 = vpop.f32.mrb[0].mxu0
  %v384 = vadd.f32 %v64, %v383
  %v385 = vpop.f32.mrb[0].mxu0
  %386 = vmatprep.mubr.f32.mxu0 0.0
  %387 = vmatmul.mubr.f32.gmra.mrb[0].mxu0 %v161
  %v388 = vpop.f32.mrb[0].mxu0
  %v389 = vadd.f32 %v64, %v388
  %v390 = vpop.f32.mrb[0].mxu0
  %391 = vdwg.mxu0
  %v392 = vmax.f32 %v234, 0.0
  %v393 = vmax.f32 %v239, 0.0
  %v394 = vmax.f32 %v244, 0.0
  %v395 = vmax.f32 %v249, 0.0
  %v396 = vmax.f32 %v254, 0.0
  %v397 = vmax.f32 %v259, 0.0
  %v398 = vmax.f32 %v264, 0.0
  %v399 = vmax.f32 %v269, 0.0
  %v400 = vmax.f32 %v274, 0.0
  %v401 = vmax.f32 %v279, 0.0
  %v402 = vmax.f32 %v284, 0.0
  %v403 = vmax.f32 %v289, 0.0
  %v404 = vmax.f32 %v294, 0.0
  %v405 = vmax.f32 %v299, 0.0
  %v406 = vmax.f32 %v304, 0.0
  %v407 = vmax.f32 %v309, 0.0
  %v408 = vmax.f32 %v314, 0.0
  %v409 = vmax.f32 %v319, 0.0
  %v410 = vmax.f32 %v324, 0.0
  %v411 = vmax.f32 %v329, 0.0
  %v412 = vmax.f32 %v334, 0.0
  %v413 = vmax.f32 %v339, 0.0
  %v414 = vmax.f32 %v344, 0.0
  %v415 = vmax.f32 %v349, 0.0
  %v416 = vmax.f32 %v354, 0.0
  %v417 = vmax.f32 %v359, 0.0
  %v418 = vmax.f32 %v364, 0.0
  %v419 = vmax.f32 %v369, 0.0
  %v420 = vmax.f32 %v374, 0.0
  %v421 = vmax.f32 %v379, 0.0
  %v422 = vmax.f32 %v384, 0.0
  %v423 = vmax.f32 %v389, 0.0
  %v424 = vld [vmem:[%s3] sm:$0xff]
  %v425 = vld [vmem:[%s3 + $0x8] sm:$0xff]
  %v426 = vld [vmem:[%s3 + $0x10] sm:$0xff]
  %v427 = vld [vmem:[%s3 + $0x18] sm:$0xff]
  %v428 = vld [vmem:[%s4] sm:$0x1]
  %v430 = vlaneseq
  %v431 = vshrl.u32 %v430, 7
  %v432 = vsub.s32 0, %v431
  %v433 = vrot.slane %v428, %v432
  %vm435 = vcmask 261120
  %v437 = vsel %vm435, %v392, 0
  %v440 = vsel %vm435, %v393, 0
  %v443 = vsel %vm435, %v394, 0
  %v446 = vsel %vm435, %v395, 0
  %v449 = vsel %vm435, %v396, 0
  %v452 = vsel %vm435, %v397, 0
  %v455 = vsel %vm435, %v398, 0
  %v458 = vsel %vm435, %v399, 0
  %v461 = vsel %vm435, %v400, 0
  %v464 = vsel %vm435, %v401, 0
  %v467 = vsel %vm435, %v402, 0
  %v470 = vsel %vm435, %v403, 0
  %v473 = vsel %vm435, %v404, 0
  %v476 = vsel %vm435, %v405, 0
  %v479 = vsel %vm435, %v406, 0
  %v482 = vsel %vm435, %v407, 0
  %v485 = vsel %vm435, %v408, 0
  %v488 = vsel %vm435, %v409, 0
  %v491 = vsel %vm435, %v410, 0
  %v494 = vsel %vm435, %v411, 0
  %v497 = vsel %vm435, %v412, 0
  %v500 = vsel %vm435, %v413, 0
  %v503 = vsel %vm435, %v414, 0
  %v506 = vsel %vm435, %v415, 0
  %v509 = vsel %vm435, %v416, 0
  %v512 = vsel %vm435, %v417, 0
  %v515 = vsel %vm435, %v418, 0
  %v518 = vsel %vm435, %v419, 0
  %v521 = vsel %vm435, %v420, 0
  %v524 = vsel %vm435, %v421, 0
  %v527 = vsel %vm435, %v422, 0
  %v530 = vsel %vm435, %v423, 0
  %532 = vmatprep.subr.mxu0 0.0
  %533 = vmatpush1.msra.mxu0 %v424
  %534 = vmatprep.subr.mxu0 0.0
  %535 = vmatpush1.msra.mxu0 %v425
  %536 = vmatprep.subr.mxu0 0.0
  %537 = vmatpush1.msra.mxu0 %v426
  %538 = vmatprep.subr.mxu0 0.0
  %539 = vmatpush1.msra.mxu0 %v427
  %540 = vmatprep.subr.mxu0 0.0
  %541 = vmatpush1.msra.mxu0 0.0
  %542 = vmatprep.subr.mxu0 0.0
  %543 = vmatpush1.msra.mxu0 0.0
  %544 = vmatprep.subr.mxu0 0.0
  %545 = vmatpush1.msra.mxu0 0.0
  %546 = vmatprep.subr.mxu0 0.0
  %547 = vmatpush1.msra.mxu0 0.0
  %548 = vmatprep.subr.mxu0 0.0
  %549 = vmatpush1.msra.mxu0 0.0
  %550 = vmatprep.subr.mxu0 0.0
  %551 = vmatpush1.msra.mxu0 0.0
  %552 = vmatprep.subr.mxu0 0.0
  %553 = vmatpush1.msra.mxu0 0.0
  %554 = vmatprep.subr.mxu0 0.0
  %555 = vmatpush1.msra.mxu0 0.0
  %556 = vmatprep.subr.mxu0 0.0
  %557 = vmatpush1.msra.mxu0 0.0
  %558 = vmatprep.subr.mxu0 0.0
  %559 = vmatpush1.msra.mxu0 0.0
  %560 = vmatprep.subr.mxu0 0.0
  %561 = vmatpush1.msra.mxu0 0.0
  %562 = vmatprep.subr.mxu0 0.0
  %563 = vmatpush1.msra.mxu0 0.0
  %564 = vmatprep.subr.mxu0 0.0
  %565 = vmatpush1.msra.mxu0 0.0
  %566 = vmatprep.subr.mxu0 0.0
  %567 = vmatpush1.msra.mxu0 0.0
  %568 = vmatprep.subr.mxu0 0.0
  %569 = vmatpush1.msra.mxu0 0.0
  %570 = vmatprep.subr.mxu0 0.0
  %571 = vmatpush1.msra.mxu0 0.0
  %572 = vmatprep.subr.mxu0 0.0
  %573 = vmatpush1.msra.mxu0 0.0
  %574 = vmatprep.subr.mxu0 0.0
  %575 = vmatpush1.msra.mxu0 0.0
  %576 = vmatprep.subr.mxu0 0.0
  %577 = vmatpush1.msra.mxu0 0.0
  %578 = vmatprep.subr.mxu0 0.0
  %579 = vmatpush1.msra.mxu0 0.0
  %580 = vmatprep.subr.mxu0 0.0
  %581 = vmatpush1.msra.mxu0 0.0
  %582 = vmatprep.subr.mxu0 0.0
  %583 = vmatpush1.msra.mxu0 0.0
  %584 = vmatprep.subr.mxu0 0.0
  %585 = vmatpush1.msra.mxu0 0.0
  %586 = vmatprep.subr.mxu0 0.0
  %587 = vmatpush1.msra.mxu0 0.0
  %588 = vmatprep.subr.mxu0 0.0
  %589 = vmatpush1.msra.mxu0 0.0
  %590 = vmatprep.subr.mxu0 0.0
  %591 = vmatpush1.msra.mxu0 0.0
  %592 = vmatprep.subr.mxu0 0.0
  %593 = vmatpush1.msra.mxu0 0.0
  %594 = vmatprep.subr.mxu0 0.0
  %595 = vmatpush1.msra.mxu0 0.0
  %596 = vmatprep.mubr.f32.mxu0 0.0
  %597 = vmatmul.mubr.f32.gmra.mrb[0].mxu0 %v437
  %v598 = vpop.f32.mrb[0].mxu0
  %v599 = vadd.f32 %v433, %v598
  %v600 = vpop.f32.mrb[0].mxu0
  %601 = vmatprep.mubr.f32.mxu0 0.0
  %602 = vmatmul.mubr.f32.gmra.mrb[0].mxu0 %v440
  %v603 = vpop.f32.mrb[0].mxu0
  %v604 = vadd.f32 %v433, %v603
  %v605 = vpop.f32.mrb[0].mxu0
  %606 = vmatprep.mubr.f32.mxu0 0.0
  %607 = vmatmul.mubr.f32.gmra.mrb[0].mxu0 %v443
  %v608 = vpop.f32.mrb[0].mxu0
  %v609 = vadd.f32 %v433, %v608
  %v610 = vpop.f32.mrb[0].mxu0
  %611 = vmatprep.mubr.f32.mxu0 0.0
  %612 = vmatmul.mubr.f32.gmra.mrb[0].mxu0 %v446
  %v613 = vpop.f32.mrb[0].mxu0
  %v614 = vadd.f32 %v433, %v613
  %v615 = vpop.f32.mrb[0].mxu0
  %616 = vmatprep.mubr.f32.mxu0 0.0
  %617 = vmatmul.mubr.f32.gmra.mrb[0].mxu0 %v449
  %v618 = vpop.f32.mrb[0].mxu0
  %v619 = vadd.f32 %v433, %v618
  %v620 = vpop.f32.mrb[0].mxu0
  %621 = vmatprep.mubr.f32.mxu0 0.0
  %622 = vmatmul.mubr.f32.gmra.mrb[0].mxu0 %v452
  %v623 = vpop.f32.mrb[0].mxu0
  %v624 = vadd.f32 %v433, %v623
  %v625 = vpop.f32.mrb[0].mxu0
  %626 = vmatprep.mubr.f32.mxu0 0.0
  %627 = vmatmul.mubr.f32.gmra.mrb[0].mxu0 %v455
  %v628 = vpop.f32.mrb[0].mxu0
  %v629 = vadd.f32 %v433, %v628
  %v630 = vpop.f32.mrb[0].mxu0
  %631 = vmatprep.mubr.f32.mxu0 0.0
  %632 = vmatmul.mubr.f32.gmra.mrb[0].mxu0 %v458
  %v633 = vpop.f32.mrb[0].mxu0
  %v634 = vadd.f32 %v433, %v633
  %v635 = vpop.f32.mrb[0].mxu0
  %636 = vmatprep.mubr.f32.mxu0 0.0
  %637 = vmatmul.mubr.f32.gmra.mrb[0].mxu0 %v461
  %v638 = vpop.f32.mrb[0].mxu0
  %v639 = vadd.f32 %v433, %v638
  %v640 = vpop.f32.mrb[0].mxu0
  %641 = vmatprep.mubr.f32.mxu0 0.0
  %642 = vmatmul.mubr.f32.gmra.mrb[0].mxu0 %v464
  %v643 = vpop.f32.mrb[0].mxu0
  %v644 = vadd.f32 %v433, %v643
  %v645 = vpop.f32.mrb[0].mxu0
  %646 = vmatprep.mubr.f32.mxu0 0.0
  %647 = vmatmul.mubr.f32.gmra.mrb[0].mxu0 %v467
  %v648 = vpop.f32.mrb[0].mxu0
  %v649 = vadd.f32 %v433, %v648
  %v650 = vpop.f32.mrb[0].mxu0
  %651 = vmatprep.mubr.f32.mxu0 0.0
  %652 = vmatmul.mubr.f32.gmra.mrb[0].mxu0 %v470
  %v653 = vpop.f32.mrb[0].mxu0
  %v654 = vadd.f32 %v433, %v653
  %v655 = vpop.f32.mrb[0].mxu0
  %656 = vmatprep.mubr.f32.mxu0 0.0
  %657 = vmatmul.mubr.f32.gmra.mrb[0].mxu0 %v473
  %v658 = vpop.f32.mrb[0].mxu0
  %v659 = vadd.f32 %v433, %v658
  %v660 = vpop.f32.mrb[0].mxu0
  %661 = vmatprep.mubr.f32.mxu0 0.0
  %662 = vmatmul.mubr.f32.gmra.mrb[0].mxu0 %v476
  %v663 = vpop.f32.mrb[0].mxu0
  %v664 = vadd.f32 %v433, %v663
  %v665 = vpop.f32.mrb[0].mxu0
  %666 = vmatprep.mubr.f32.mxu0 0.0
  %667 = vmatmul.mubr.f32.gmra.mrb[0].mxu0 %v479
  %v668 = vpop.f32.mrb[0].mxu0
  %v669 = vadd.f32 %v433, %v668
  %v670 = vpop.f32.mrb[0].mxu0
  %671 = vmatprep.mubr.f32.mxu0 0.0
  %672 = vmatmul.mubr.f32.gmra.mrb[0].mxu0 %v482
  %v673 = vpop.f32.mrb[0].mxu0
  %v674 = vadd.f32 %v433, %v673
  %v675 = vpop.f32.mrb[0].mxu0
  %676 = vmatprep.mubr.f32.mxu0 0.0
  %677 = vmatmul.mubr.f32.gmra.mrb[0].mxu0 %v485
  %v678 = vpop.f32.mrb[0].mxu0
  %v679 = vadd.f32 %v433, %v678
  %v680 = vpop.f32.mrb[0].mxu0
  %681 = vmatprep.mubr.f32.mxu0 0.0
  %682 = vmatmul.mubr.f32.gmra.mrb[0].mxu0 %v488
  %v683 = vpop.f32.mrb[0].mxu0
  %v684 = vadd.f32 %v433, %v683
  %v685 = vpop.f32.mrb[0].mxu0
  %686 = vmatprep.mubr.f32.mxu0 0.0
  %687 = vmatmul.mubr.f32.gmra.mrb[0].mxu0 %v491
  %v688 = vpop.f32.mrb[0].mxu0
  %v689 = vadd.f32 %v433, %v688
  %v690 = vpop.f32.mrb[0].mxu0
  %691 = vmatprep.mubr.f32.mxu0 0.0
  %692 = vmatmul.mubr.f32.gmra.mrb[0].mxu0 %v494
  %v693 = vpop.f32.mrb[0].mxu0
  %v694 = vadd.f32 %v433, %v693
  %v695 = vpop.f32.mrb[0].mxu0
  %696 = vmatprep.mubr.f32.mxu0 0.0
  %697 = vmatmul.mubr.f32.gmra.mrb[0].mxu0 %v497
  %v698 = vpop.f32.mrb[0].mxu0
  %v699 = vadd.f32 %v433, %v698
  %v700 = vpop.f32.mrb[0].mxu0
  %701 = vmatprep.mubr.f32.mxu0 0.0
  %702 = vmatmul.mubr.f32.gmra.mrb[0].mxu0 %v500
  %v703 = vpop.f32.mrb[0].mxu0
  %v704 = vadd.f32 %v433, %v703
  %v705 = vpop.f32.mrb[0].mxu0
  %706 = vmatprep.mubr.f32.mxu0 0.0
  %707 = vmatmul.mubr.f32.gmra.mrb[0].mxu0 %v503
  %v708 = vpop.f32.mrb[0].mxu0
  %v709 = vadd.f32 %v433, %v708
  %v710 = vpop.f32.mrb[0].mxu0
  %711 = vmatprep.mubr.f32.mxu0 0.0
  %712 = vmatmul.mubr.f32.gmra.mrb[0].mxu0 %v506
  %v713 = vpop.f32.mrb[0].mxu0
  %v714 = vadd.f32 %v433, %v713
  %v715 = vpop.f32.mrb[0].mxu0
  %716 = vmatprep.mubr.f32.mxu0 0.0
  %717 = vmatmul.mubr.f32.gmra.mrb[0].mxu0 %v509
  %v718 = vpop.f32.mrb[0].mxu0
  %v719 = vadd.f32 %v433, %v718
  %v720 = vpop.f32.mrb[0].mxu0
  %721 = vmatprep.mubr.f32.mxu0 0.0
  %722 = vmatmul.mubr.f32.gmra.mrb[0].mxu0 %v512
  %v723 = vpop.f32.mrb[0].mxu0
  %v724 = vadd.f32 %v433, %v723
  %v725 = vpop.f32.mrb[0].mxu0
  %726 = vmatprep.mubr.f32.mxu0 0.0
  %727 = vmatmul.mubr.f32.gmra.mrb[0].mxu0 %v515
  %v728 = vpop.f32.mrb[0].mxu0
  %v729 = vadd.f32 %v433, %v728
  %v730 = vpop.f32.mrb[0].mxu0
  %731 = vmatprep.mubr.f32.mxu0 0.0
  %732 = vmatmul.mubr.f32.gmra.mrb[0].mxu0 %v518
  %v733 = vpop.f32.mrb[0].mxu0
  %v734 = vadd.f32 %v433, %v733
  %v735 = vpop.f32.mrb[0].mxu0
  %736 = vmatprep.mubr.f32.mxu0 0.0
  %737 = vmatmul.mubr.f32.gmra.mrb[0].mxu0 %v521
  %v738 = vpop.f32.mrb[0].mxu0
  %v739 = vadd.f32 %v433, %v738
  %v740 = vpop.f32.mrb[0].mxu0
  %741 = vmatprep.mubr.f32.mxu0 0.0
  %742 = vmatmul.mubr.f32.gmra.mrb[0].mxu0 %v524
  %v743 = vpop.f32.mrb[0].mxu0
  %v744 = vadd.f32 %v433, %v743
  %v745 = vpop.f32.mrb[0].mxu0
  %746 = vmatprep.mubr.f32.mxu0 0.0
  %747 = vmatmul.mubr.f32.gmra.mrb[0].mxu0 %v527
  %v748 = vpop.f32.mrb[0].mxu0
  %v749 = vadd.f32 %v433, %v748
  %v750 = vpop.f32.mrb[0].mxu0
  %751 = vmatprep.mubr.f32.mxu0 0.0
  %752 = vmatmul.mubr.f32.gmra.mrb[0].mxu0 %v530
  %v753 = vpop.f32.mrb[0].mxu0
  %v754 = vadd.f32 %v433, %v753
  %v755 = vpop.f32.mrb[0].mxu0
  %756 = vdwg.mxu0
  %v757 = vmax.f32 %v599, 0.0
  %v758 = vmax.f32 %v604, 0.0
  %v759 = vmax.f32 %v609, 0.0
  %v760 = vmax.f32 %v614, 0.0
  %v761 = vmax.f32 %v619, 0.0
  %v762 = vmax.f32 %v624, 0.0
  %v763 = vmax.f32 %v629, 0.0
  %v764 = vmax.f32 %v634, 0.0
  %v765 = vmax.f32 %v639, 0.0
  %v766 = vmax.f32 %v644, 0.0
  %v767 = vmax.f32 %v649, 0.0
  %v768 = vmax.f32 %v654, 0.0
  %v769 = vmax.f32 %v659, 0.0
  %v770 = vmax.f32 %v664, 0.0
  %v771 = vmax.f32 %v669, 0.0
  %v772 = vmax.f32 %v674, 0.0
  %v773 = vmax.f32 %v679, 0.0
  %v774 = vmax.f32 %v684, 0.0
  %v775 = vmax.f32 %v689, 0.0
  %v776 = vmax.f32 %v694, 0.0
  %v777 = vmax.f32 %v699, 0.0
  %v778 = vmax.f32 %v704, 0.0
  %v779 = vmax.f32 %v709, 0.0
  %v780 = vmax.f32 %v714, 0.0
  %v781 = vmax.f32 %v719, 0.0
  %v782 = vmax.f32 %v724, 0.0
  %v783 = vmax.f32 %v729, 0.0
  %v784 = vmax.f32 %v734, 0.0
  %v785 = vmax.f32 %v739, 0.0
  %v786 = vmax.f32 %v744, 0.0
  %v787 = vmax.f32 %v749, 0.0
  %v788 = vmax.f32 %v754, 0.0
  %v789 = vld [vmem:[%s5] sm:$0xff]
  %v790 = vld [vmem:[%s5 + $0x8] sm:$0xff]
  %v791 = vld [vmem:[%s5 + $0x10] sm:$0xff]
  %v792 = vld [vmem:[%s5 + $0x18] sm:$0xff]
  %v793 = vld [vmem:[%s6] sm:$0x1]
  %v795 = vlaneseq
  %v796 = vshrl.u32 %v795, 7
  %v797 = vsub.s32 0, %v796
  %v798 = vrot.slane %v793, %v797
  %v801 = vsel %vm435, %v757, 0
  %v804 = vsel %vm435, %v758, 0
  %v807 = vsel %vm435, %v759, 0
  %v810 = vsel %vm435, %v760, 0
  %v813 = vsel %vm435, %v761, 0
  %v816 = vsel %vm435, %v762, 0
  %v819 = vsel %vm435, %v763, 0
  %v822 = vsel %vm435, %v764, 0
  %v825 = vsel %vm435, %v765, 0
  %v828 = vsel %vm435, %v766, 0
  %v831 = vsel %vm435, %v767, 0
  %v834 = vsel %vm435, %v768, 0
  %v837 = vsel %vm435, %v769, 0
  %v840 = vsel %vm435, %v770, 0
  %v843 = vsel %vm435, %v771, 0
  %v846 = vsel %vm435, %v772, 0
  %v849 = vsel %vm435, %v773, 0
  %v852 = vsel %vm435, %v774, 0
  %v855 = vsel %vm435, %v775, 0
  %v858 = vsel %vm435, %v776, 0
  %v861 = vsel %vm435, %v777, 0
  %v864 = vsel %vm435, %v778, 0
  %v867 = vsel %vm435, %v779, 0
  %v870 = vsel %vm435, %v780, 0
  %v873 = vsel %vm435, %v781, 0
  %v876 = vsel %vm435, %v782, 0
  %v879 = vsel %vm435, %v783, 0
  %v882 = vsel %vm435, %v784, 0
  %v885 = vsel %vm435, %v785, 0
  %v888 = vsel %vm435, %v786, 0
  %v891 = vsel %vm435, %v787, 0
  %v894 = vsel %vm435, %v788, 0
  %896 = vmatprep.subr.mxu0 0.0
  %897 = vmatpush1.msra.mxu0 %v789
  %898 = vmatprep.subr.mxu0 0.0
  %899 = vmatpush1.msra.mxu0 %v790
  %900 = vmatprep.subr.mxu0 0.0
  %901 = vmatpush1.msra.mxu0 %v791
  %902 = vmatprep.subr.mxu0 0.0
  %903 = vmatpush1.msra.mxu0 %v792
  %904 = vmatprep.subr.mxu0 0.0
  %905 = vmatpush1.msra.mxu0 0.0
  %906 = vmatprep.subr.mxu0 0.0
  %907 = vmatpush1.msra.mxu0 0.0
  %908 = vmatprep.subr.mxu0 0.0
  %909 = vmatpush1.msra.mxu0 0.0
  %910 = vmatprep.subr.mxu0 0.0
  %911 = vmatpush1.msra.mxu0 0.0
  %912 = vmatprep.subr.mxu0 0.0
  %913 = vmatpush1.msra.mxu0 0.0
  %914 = vmatprep.subr.mxu0 0.0
  %915 = vmatpush1.msra.mxu0 0.0
  %916 = vmatprep.subr.mxu0 0.0
  %917 = vmatpush1.msra.mxu0 0.0
  %918 = vmatprep.subr.mxu0 0.0
  %919 = vmatpush1.msra.mxu0 0.0
  %920 = vmatprep.subr.mxu0 0.0
  %921 = vmatpush1.msra.mxu0 0.0
  %922 = vmatprep.subr.mxu0 0.0
  %923 = vmatpush1.msra.mxu0 0.0
  %924 = vmatprep.subr.mxu0 0.0
  %925 = vmatpush1.msra.mxu0 0.0
  %926 = vmatprep.subr.mxu0 0.0
  %927 = vmatpush1.msra.mxu0 0.0
  %928 = vmatprep.subr.mxu0 0.0
  %929 = vmatpush1.msra.mxu0 0.0
  %930 = vmatprep.subr.mxu0 0.0
  %931 = vmatpush1.msra.mxu0 0.0
  %932 = vmatprep.subr.mxu0 0.0
  %933 = vmatpush1.msra.mxu0 0.0
  %934 = vmatprep.subr.mxu0 0.0
  %935 = vmatpush1.msra.mxu0 0.0
  %936 = vmatprep.subr.mxu0 0.0
  %937 = vmatpush1.msra.mxu0 0.0
  %938 = vmatprep.subr.mxu0 0.0
  %939 = vmatpush1.msra.mxu0 0.0
  %940 = vmatprep.subr.mxu0 0.0
  %941 = vmatpush1.msra.mxu0 0.0
  %942 = vmatprep.subr.mxu0 0.0
  %943 = vmatpush1.msra.mxu0 0.0
  %944 = vmatprep.subr.mxu0 0.0
  %945 = vmatpush1.msra.mxu0 0.0
  %946 = vmatprep.subr.mxu0 0.0
  %947 = vmatpush1.msra.mxu0 0.0
  %948 = vmatprep.subr.mxu0 0.0
  %949 = vmatpush1.msra.mxu0 0.0
  %950 = vmatprep.subr.mxu0 0.0
  %951 = vmatpush1.msra.mxu0 0.0
  %952 = vmatprep.subr.mxu0 0.0
  %953 = vmatpush1.msra.mxu0 0.0
  %954 = vmatprep.subr.mxu0 0.0
  %955 = vmatpush1.msra.mxu0 0.0
  %956 = vmatprep.subr.mxu0 0.0
  %957 = vmatpush1.msra.mxu0 0.0
  %958 = vmatprep.subr.mxu0 0.0
  %959 = vmatpush1.msra.mxu0 0.0
  %960 = vmatprep.mubr.f32.mxu0 0.0
  %961 = vmatmul.mubr.f32.gmra.mrb[0].mxu0 %v801
  %v962 = vpop.f32.mrb[0].mxu0
  %v963 = vadd.f32 %v798, %v962
  %v964 = vpop.f32.mrb[0].mxu0
  %965 = vmatprep.mubr.f32.mxu0 0.0
  %966 = vmatmul.mubr.f32.gmra.mrb[0].mxu0 %v804
  %v967 = vpop.f32.mrb[0].mxu0
  %v968 = vadd.f32 %v798, %v967
  %v969 = vpop.f32.mrb[0].mxu0
  %970 = vmatprep.mubr.f32.mxu0 0.0
  %971 = vmatmul.mubr.f32.gmra.mrb[0].mxu0 %v807
  %v972 = vpop.f32.mrb[0].mxu0
  %v973 = vadd.f32 %v798, %v972
  %v974 = vpop.f32.mrb[0].mxu0
  %975 = vmatprep.mubr.f32.mxu0 0.0
  %976 = vmatmul.mubr.f32.gmra.mrb[0].mxu0 %v810
  %v977 = vpop.f32.mrb[0].mxu0
  %v978 = vadd.f32 %v798, %v977
  %v979 = vpop.f32.mrb[0].mxu0
  %980 = vmatprep.mubr.f32.mxu0 0.0
  %981 = vmatmul.mubr.f32.gmra.mrb[0].mxu0 %v813
  %v982 = vpop.f32.mrb[0].mxu0
  %v983 = vadd.f32 %v798, %v982
  %v984 = vpop.f32.mrb[0].mxu0
  %985 = vmatprep.mubr.f32.mxu0 0.0
  %986 = vmatmul.mubr.f32.gmra.mrb[0].mxu0 %v816
  %v987 = vpop.f32.mrb[0].mxu0
  %v988 = vadd.f32 %v798, %v987
  %v989 = vpop.f32.mrb[0].mxu0
  %990 = vmatprep.mubr.f32.mxu0 0.0
  %991 = vmatmul.mubr.f32.gmra.mrb[0].mxu0 %v819
  %v992 = vpop.f32.mrb[0].mxu0
  %v993 = vadd.f32 %v798, %v992
  %v994 = vpop.f32.mrb[0].mxu0
  %995 = vmatprep.mubr.f32.mxu0 0.0
  %996 = vmatmul.mubr.f32.gmra.mrb[0].mxu0 %v822
  %v997 = vpop.f32.mrb[0].mxu0
  %v998 = vadd.f32 %v798, %v997
  %v999 = vpop.f32.mrb[0].mxu0
  %1000 = vmatprep.mubr.f32.mxu0 0.0
  %1001 = vmatmul.mubr.f32.gmra.mrb[0].mxu0 %v825
  %v1002 = vpop.f32.mrb[0].mxu0
  %v1003 = vadd.f32 %v798, %v1002
  %v1004 = vpop.f32.mrb[0].mxu0
  %1005 = vmatprep.mubr.f32.mxu0 0.0
  %1006 = vmatmul.mubr.f32.gmra.mrb[0].mxu0 %v828
  %v1007 = vpop.f32.mrb[0].mxu0
  %v1008 = vadd.f32 %v798, %v1007
  %v1009 = vpop.f32.mrb[0].mxu0
  %1010 = vmatprep.mubr.f32.mxu0 0.0
  %1011 = vmatmul.mubr.f32.gmra.mrb[0].mxu0 %v831
  %v1012 = vpop.f32.mrb[0].mxu0
  %v1013 = vadd.f32 %v798, %v1012
  %v1014 = vpop.f32.mrb[0].mxu0
  %1015 = vmatprep.mubr.f32.mxu0 0.0
  %1016 = vmatmul.mubr.f32.gmra.mrb[0].mxu0 %v834
  %v1017 = vpop.f32.mrb[0].mxu0
  %v1018 = vadd.f32 %v798, %v1017
  %v1019 = vpop.f32.mrb[0].mxu0
  %1020 = vmatprep.mubr.f32.mxu0 0.0
  %1021 = vmatmul.mubr.f32.gmra.mrb[0].mxu0 %v837
  %v1022 = vpop.f32.mrb[0].mxu0
  %v1023 = vadd.f32 %v798, %v1022
  %v1024 = vpop.f32.mrb[0].mxu0
  %1025 = vmatprep.mubr.f32.mxu0 0.0
  %1026 = vmatmul.mubr.f32.gmra.mrb[0].mxu0 %v840
  %v1027 = vpop.f32.mrb[0].mxu0
  %v1028 = vadd.f32 %v798, %v1027
  %v1029 = vpop.f32.mrb[0].mxu0
  %1030 = vmatprep.mubr.f32.mxu0 0.0
  %1031 = vmatmul.mubr.f32.gmra.mrb[0].mxu0 %v843
  %v1032 = vpop.f32.mrb[0].mxu0
  %v1033 = vadd.f32 %v798, %v1032
  %v1034 = vpop.f32.mrb[0].mxu0
  %1035 = vmatprep.mubr.f32.mxu0 0.0
  %1036 = vmatmul.mubr.f32.gmra.mrb[0].mxu0 %v846
  %v1037 = vpop.f32.mrb[0].mxu0
  %v1038 = vadd.f32 %v798, %v1037
  %v1039 = vpop.f32.mrb[0].mxu0
  %1040 = vmatprep.mubr.f32.mxu0 0.0
  %1041 = vmatmul.mubr.f32.gmra.mrb[0].mxu0 %v849
  %v1042 = vpop.f32.mrb[0].mxu0
  %v1043 = vadd.f32 %v798, %v1042
  %v1044 = vpop.f32.mrb[0].mxu0
  %1045 = vmatprep.mubr.f32.mxu0 0.0
  %1046 = vmatmul.mubr.f32.gmra.mrb[0].mxu0 %v852
  %v1047 = vpop.f32.mrb[0].mxu0
  %v1048 = vadd.f32 %v798, %v1047
  %v1049 = vpop.f32.mrb[0].mxu0
  %1050 = vmatprep.mubr.f32.mxu0 0.0
  %1051 = vmatmul.mubr.f32.gmra.mrb[0].mxu0 %v855
  %v1052 = vpop.f32.mrb[0].mxu0
  %v1053 = vadd.f32 %v798, %v1052
  %v1054 = vpop.f32.mrb[0].mxu0
  %1055 = vmatprep.mubr.f32.mxu0 0.0
  %1056 = vmatmul.mubr.f32.gmra.mrb[0].mxu0 %v858
  %v1057 = vpop.f32.mrb[0].mxu0
  %v1058 = vadd.f32 %v798, %v1057
  %v1059 = vpop.f32.mrb[0].mxu0
  %1060 = vmatprep.mubr.f32.mxu0 0.0
  %1061 = vmatmul.mubr.f32.gmra.mrb[0].mxu0 %v861
  %v1062 = vpop.f32.mrb[0].mxu0
  %v1063 = vadd.f32 %v798, %v1062
  %v1064 = vpop.f32.mrb[0].mxu0
  %1065 = vmatprep.mubr.f32.mxu0 0.0
  %1066 = vmatmul.mubr.f32.gmra.mrb[0].mxu0 %v864
  %v1067 = vpop.f32.mrb[0].mxu0
  %v1068 = vadd.f32 %v798, %v1067
  %v1069 = vpop.f32.mrb[0].mxu0
  %1070 = vmatprep.mubr.f32.mxu0 0.0
  %1071 = vmatmul.mubr.f32.gmra.mrb[0].mxu0 %v867
  %v1072 = vpop.f32.mrb[0].mxu0
  %v1073 = vadd.f32 %v798, %v1072
  %v1074 = vpop.f32.mrb[0].mxu0
  %1075 = vmatprep.mubr.f32.mxu0 0.0
  %1076 = vmatmul.mubr.f32.gmra.mrb[0].mxu0 %v870
  %v1077 = vpop.f32.mrb[0].mxu0
  %v1078 = vadd.f32 %v798, %v1077
  %v1079 = vpop.f32.mrb[0].mxu0
  %1080 = vmatprep.mubr.f32.mxu0 0.0
  %1081 = vmatmul.mubr.f32.gmra.mrb[0].mxu0 %v873
  %v1082 = vpop.f32.mrb[0].mxu0
  %v1083 = vadd.f32 %v798, %v1082
  %v1084 = vpop.f32.mrb[0].mxu0
  %1085 = vmatprep.mubr.f32.mxu0 0.0
  %1086 = vmatmul.mubr.f32.gmra.mrb[0].mxu0 %v876
  %v1087 = vpop.f32.mrb[0].mxu0
  %v1088 = vadd.f32 %v798, %v1087
  %v1089 = vpop.f32.mrb[0].mxu0
  %1090 = vmatprep.mubr.f32.mxu0 0.0
  %1091 = vmatmul.mubr.f32.gmra.mrb[0].mxu0 %v879
  %v1092 = vpop.f32.mrb[0].mxu0
  %v1093 = vadd.f32 %v798, %v1092
  %v1094 = vpop.f32.mrb[0].mxu0
  %1095 = vmatprep.mubr.f32.mxu0 0.0
  %1096 = vmatmul.mubr.f32.gmra.mrb[0].mxu0 %v882
  %v1097 = vpop.f32.mrb[0].mxu0
  %v1098 = vadd.f32 %v798, %v1097
  %v1099 = vpop.f32.mrb[0].mxu0
  %1100 = vmatprep.mubr.f32.mxu0 0.0
  %1101 = vmatmul.mubr.f32.gmra.mrb[0].mxu0 %v885
  %v1102 = vpop.f32.mrb[0].mxu0
  %v1103 = vadd.f32 %v798, %v1102
  %v1104 = vpop.f32.mrb[0].mxu0
  %1105 = vmatprep.mubr.f32.mxu0 0.0
  %1106 = vmatmul.mubr.f32.gmra.mrb[0].mxu0 %v888
  %v1107 = vpop.f32.mrb[0].mxu0
  %v1108 = vadd.f32 %v798, %v1107
  %v1109 = vpop.f32.mrb[0].mxu0
  %1110 = vmatprep.mubr.f32.mxu0 0.0
  %1111 = vmatmul.mubr.f32.gmra.mrb[0].mxu0 %v891
  %v1112 = vpop.f32.mrb[0].mxu0
  %v1113 = vadd.f32 %v798, %v1112
  %v1114 = vpop.f32.mrb[0].mxu0
  %1115 = vmatprep.mubr.f32.mxu0 0.0
  %1116 = vmatmul.mubr.f32.gmra.mrb[0].mxu0 %v894
  %v1117 = vpop.f32.mrb[0].mxu0
  %v1118 = vadd.f32 %v798, %v1117
  %v1119 = vpop.f32.mrb[0].mxu0
  %1120 = vdwg.mxu0
  %1121 = vst.msk [vmem:[%s7] sm:$0xff] %vm66, %v963
  %1122 = vst.msk [vmem:[%s7 + $0x8] sm:$0xff] %vm66, %v968
  %1123 = vst.msk [vmem:[%s7 + $0x10] sm:$0xff] %vm66, %v973
  %1124 = vst.msk [vmem:[%s7 + $0x18] sm:$0xff] %vm66, %v978
  %1125 = vst.msk [vmem:[%s7 + $0x20] sm:$0xff] %vm66, %v983
  %1126 = vst.msk [vmem:[%s7 + $0x28] sm:$0xff] %vm66, %v988
  %1127 = vst.msk [vmem:[%s7 + $0x30] sm:$0xff] %vm66, %v993
  %1128 = vst.msk [vmem:[%s7 + $0x38] sm:$0xff] %vm66, %v998
  %1129 = vst.msk [vmem:[%s7 + $0x40] sm:$0xff] %vm66, %v1003
  %1130 = vst.msk [vmem:[%s7 + $0x48] sm:$0xff] %vm66, %v1008
  %1131 = vst.msk [vmem:[%s7 + $0x50] sm:$0xff] %vm66, %v1013
  %1132 = vst.msk [vmem:[%s7 + $0x58] sm:$0xff] %vm66, %v1018
  %1133 = vst.msk [vmem:[%s7 + $0x60] sm:$0xff] %vm66, %v1023
  %1134 = vst.msk [vmem:[%s7 + $0x68] sm:$0xff] %vm66, %v1028
  %1135 = vst.msk [vmem:[%s7 + $0x70] sm:$0xff] %vm66, %v1033
  %1136 = vst.msk [vmem:[%s7 + $0x78] sm:$0xff] %vm66, %v1038
  %1137 = vst.msk [vmem:[%s7 + $0x80] sm:$0xff] %vm66, %v1043
  %1138 = vst.msk [vmem:[%s7 + $0x88] sm:$0xff] %vm66, %v1048
  %1139 = vst.msk [vmem:[%s7 + $0x90] sm:$0xff] %vm66, %v1053
  %1140 = vst.msk [vmem:[%s7 + $0x98] sm:$0xff] %vm66, %v1058
  %1141 = vst.msk [vmem:[%s7 + $0xa0] sm:$0xff] %vm66, %v1063
  %1142 = vst.msk [vmem:[%s7 + $0xa8] sm:$0xff] %vm66, %v1068
  %1143 = vst.msk [vmem:[%s7 + $0xb0] sm:$0xff] %vm66, %v1073
  %1144 = vst.msk [vmem:[%s7 + $0xb8] sm:$0xff] %vm66, %v1078
  %1145 = vst.msk [vmem:[%s7 + $0xc0] sm:$0xff] %vm66, %v1083
  %1146 = vst.msk [vmem:[%s7 + $0xc8] sm:$0xff] %vm66, %v1088
  %1147 = vst.msk [vmem:[%s7 + $0xd0] sm:$0xff] %vm66, %v1093
  %1148 = vst.msk [vmem:[%s7 + $0xd8] sm:$0xff] %vm66, %v1098
  %1149 = vst.msk [vmem:[%s7 + $0xe0] sm:$0xff] %vm66, %v1103
  %1150 = vst.msk [vmem:[%s7 + $0xe8] sm:$0xff] %vm66, %v1108
  %1151 = vst.msk [vmem:[%s7 + $0xf0] sm:$0xff] %vm66, %v1113
  %1152 = vst.msk [vmem:[%s7 + $0xf8] sm:$0xff] %vm66, %v1118
  // Predicated region
  $region30: #{controlnet_forward.1} parent=0 // pred_check
    _
  $region31: #{controlnet_forward.1} parent=0 // pred_check_branch
    %1154 = sbr.rel (0) target = $region33
  $region32: #{controlnet_forward.1} parent=0 // pred_region
    _
  $region33: #{controlnet_forward.1} parent=0 // pred_fallthru
    _
  // Predicated region
  $region34: #{controlnet_forward.1} parent=0 // pred_check
    _
  $region35: #{controlnet_forward.1} parent=0 // pred_check_branch
    %1156 = sbr.rel (0) target = $region37
  $region36: #{controlnet_forward.1} parent=0 // pred_region
    _
  $region37: #{controlnet_forward.1} parent=0 // pred_fallthru
    _

</llo_original>
